<compile_context>
chip_gen: v5e
topology: v5e:2x2
jax: 0.10.0
libtpu: 0.0.40
codegen_flags: <defaults>
</compile_context>

<pallas_src>
import functools
import math

import jax
import jax.numpy as jnp
from jax.experimental import pallas as pl
from jax.experimental.pallas import tpu as pltpu


def _round_up(x: int, m: int) -> int:
    return ((x + m - 1) // m) * m


def _condition_encoder_kernel(x_ref, w1_ref, b1_ref, w2_ref, b2_ref, w3_ref, b3_ref, o_ref):
    # Layer 1: Linear(condition_dim, d_model // 2) + ReLU
    #   bf16 operands on the MXU, f32 accumulation; bias/ReLU in f32 (VPU-friendly on v5e).
    h1 = jnp.dot(x_ref[...], w1_ref[...], preferred_element_type=jnp.float32) + b1_ref[...]
    h1 = jnp.maximum(h1, 0.0)
    # Layer 2: Linear(d_model // 2, d_model) + ReLU
    h2 = jnp.dot(h1.astype(jnp.bfloat16), w2_ref[...], preferred_element_type=jnp.float32) + b2_ref[...]
    h2 = jnp.maximum(h2, 0.0)
    # Layer 3: Linear(d_model, d_model)  (no activation, matches the Sequential)
    out = jnp.dot(h2.astype(jnp.bfloat16), w3_ref[...], preferred_element_type=jnp.float32) + b3_ref[...]
    o_ref[...] = out.astype(o_ref.dtype)


def _pad2(a, rows, cols, dtype):
    a = a.astype(dtype)
    return jnp.pad(a, ((0, rows - a.shape[0]), (0, cols - a.shape[1])))


@functools.partial(jax.jit, static_argnames=("block_batch",))
def condition_encoder(conditions, params, *, block_batch: int = 512):
    """conditions: [B, condition_dim] float32 -> [B, d_model] float32."""
    w1, b1, w2, b2, w3, b3 = params
    batch, cd = conditions.shape
    hid = w1.shape[1]
    dm = w3.shape[1]

    # Lane-dense padded feature dims (exact under zero padding: padded hidden units
    # have zero weight + zero bias -> ReLU(0)=0 -> contribute nothing downstream).
    cdp = _round_up(cd, 128)
    hidp = _round_up(hid, 128)
    dmp = _round_up(dm, 128)

    # Batch tile: big tiles amortize the ~0.35 us/grid-step overhead; tiny batches
    # collapse to a single sublane-aligned tile.
    tb = block_batch if batch >= block_batch else _round_up(batch, 8)
    bp = _round_up(batch, tb)

    xp = _pad2(conditions, bp, cdp, jnp.bfloat16)
    w1p = _pad2(w1, cdp, hidp, jnp.bfloat16)
    w2p = _pad2(w2, hidp, dmp, jnp.bfloat16)
    w3p = _pad2(w3, dmp, dmp, jnp.bfloat16)
    b1p = _pad2(b1, 1, hidp, jnp.float32)
    b2p = _pad2(b2, 1, dmp, jnp.float32)
    b3p = _pad2(b3, 1, dmp, jnp.float32)

    grid = (bp // tb,)

    # Cost + VMEM bookkeeping (Python ints: shapes are static at trace time).
    weight_bytes = 2 * (cdp * hidp + hidp * dmp + dmp * dmp) + 4 * (hidp + 2 * dmp)
    act_bytes = 2 * bp * cdp + 4 * bp * dmp
    flops = 2 * bp * (cdp * hidp + hidp * dmp + dmp * dmp)
    # resident weights + double-buffered x (bf16) / out (f32) tiles + live h1/h2.
    est_vmem = weight_bytes + 2 * (tb * cdp * 2 + tb * dmp * 4) + 4 * tb * (hidp + dmp)
    vmem_limit = int(min(max(2 * est_vmem, 32 * 1024 * 1024), 60 * 1024 * 1024))

    const_map = lambda i: (0, 0)

    out_padded = pl.pallas_call(
        _condition_encoder_kernel,
        out_shape=jax.ShapeDtypeStruct((bp, dmp), jnp.float32),
        grid=grid,
        in_specs=[
            pl.BlockSpec((tb, cdp), lambda i: (i, 0)),   # batch tile, pipelined
            pl.BlockSpec((cdp, hidp), const_map),        # weights/biases: VMEM-resident
            pl.BlockSpec((1, hidp), const_map),
            pl.BlockSpec((hidp, dmp), const_map),
            pl.BlockSpec((1, dmp), const_map),
            pl.BlockSpec((dmp, dmp), const_map),
            pl.BlockSpec((1, dmp), const_map),
        ],
        out_specs=pl.BlockSpec((tb, dmp), lambda i: (i, 0)),
        compiler_params=pltpu.CompilerParams(
            dimension_semantics=("parallel",),
            vmem_limit_bytes=vmem_limit,
        ),
        cost_estimate=pl.CostEstimate(
            flops=flops,
            transcendentals=0,
            bytes_accessed=weight_bytes + act_bytes,
        ),
    )(xp, w1p, b1p, w2p, b2p, w3p, b3p)

    return out_padded[:batch, :dm]


def init_params(key, condition_dim, d_model):
    """Deterministic init mirroring nn.Linear's kaiming-uniform (U[-1/sqrt(fan_in), +1/sqrt(fan_in)]).

    Weights are stored as [in_features, out_features] (transpose of PyTorch's [out, in])
    so the kernel computes y = x @ W + b directly.
    """
    dims = [(condition_dim, d_model // 2), (d_model // 2, d_model), (d_model, d_model)]
    params = []
    for i, (fan_in, fan_out) in enumerate(dims):
        kw, kb = jax.random.split(jax.random.fold_in(key, i))
        bound = 1.0 / math.sqrt(fan_in)
        w = jax.random.uniform(kw, (fan_in, fan_out), jnp.float32, -bound, bound)
        b = jax.random.uniform(kb, (1, fan_out), jnp.float32, -bound, bound)
        params += [w, b]
    return tuple(params)


def reference_f32(conditions, params):
    """Plain-JAX f32 reference of the original module's forward pass."""
    w1, b1, w2, b2, w3, b3 = params
    h = jnp.maximum(conditions @ w1 + b1, 0.0)
    h = jnp.maximum(h @ w2 + b2, 0.0)
    return h @ w3 + b3


def reference_bf16(conditions, params):
    """Reference applying the same bf16-operand / f32-accumulate scheme as the kernel."""
    w1, b1, w2, b2, w3, b3 = params
    bf = jnp.bfloat16
    h = jnp.maximum(
        jnp.dot(conditions.astype(bf), w1.astype(bf), preferred_element_type=jnp.float32) + b1, 0.0)
    h = jnp.maximum(
        jnp.dot(h.astype(bf), w2.astype(bf), preferred_element_type=jnp.float32) + b2, 0.0)
    return jnp.dot(h.astype(bf), w3.astype(bf), preferred_element_type=jnp.float32) + b3


if __name__ == "__main__":
    key = jax.random.PRNGKey(0)
    batch, condition_dim, d_model = 2, 4, 32

    k_in, k_p, k_big = jax.random.split(key, 3)
    conditions = jax.random.normal(k_in, (batch, condition_dim), jnp.float32)
    params = init_params(k_p, condition_dim, d_model)

    out = condition_encoder(conditions, params)
    out = jax.block_until_ready(out)
    assert out.shape == (batch, d_model)

    # Tight check against a reference using the same bf16-operand matmuls.
    ref_bf = reference_bf16(conditions, params)
    assert jnp.allclose(out, ref_bf, atol=1e-4, rtol=1e-4)
    # Loose sanity check against the full-f32 module semantics.
    ref_f32 = reference_f32(conditions, params)
    assert jnp.allclose(out, ref_f32, atol=5e-2, rtol=5e-2)

    # Second smoke test: batch not a multiple of the tile -> exercises grid>1 + padding.
    big = jax.random.normal(k_big, (600, condition_dim), jnp.float32)
    out_big = jax.block_until_ready(condition_encoder(big, params))
    assert out_big.shape == (600, d_model)
    assert jnp.allclose(out_big, reference_bf16(big, params), atol=1e-4, rtol=1e-4)

    print("KERNEL_OK")
</pallas_src>

<mosaic_0001>
module attributes {stable_mosaic.version = 11 : i64} {
  func.func @_condition_encoder_kernel(%arg0: i32, %arg1: memref<8x128xbf16, #tpu.memory_space<vmem>>, %arg2: memref<128x128xbf16, #tpu.memory_space<vmem>>, %arg3: memref<1x128xf32, #tpu.memory_space<vmem>>, %arg4: memref<128x128xbf16, #tpu.memory_space<vmem>>, %arg5: memref<1x128xf32, #tpu.memory_space<vmem>>, %arg6: memref<128x128xbf16, #tpu.memory_space<vmem>>, %arg7: memref<1x128xf32, #tpu.memory_space<vmem>>, %arg8: memref<8x128xf32, #tpu.memory_space<vmem>>) attributes {dimension_semantics = [#tpu.dimension_semantics<parallel>], iteration_bounds = array<i64: 1>, scalar_prefetch = 0 : i64, scratch_operands = 0 : i64, tpu.core_type = #tpu.core_type<tc>, window_params = [{transform_indices = @transform_0, window_bounds = array<i64: 8, 128>}, {pipeline_mode = #tpu.pipeline_mode<synchronous>, transform_indices = @transform_1, window_bounds = array<i64: 128, 128>}, {pipeline_mode = #tpu.pipeline_mode<synchronous>, transform_indices = @transform_2, window_bounds = array<i64: 1, 128>}, {pipeline_mode = #tpu.pipeline_mode<synchronous>, transform_indices = @transform_3, window_bounds = array<i64: 128, 128>}, {pipeline_mode = #tpu.pipeline_mode<synchronous>, transform_indices = @transform_4, window_bounds = array<i64: 1, 128>}, {pipeline_mode = #tpu.pipeline_mode<synchronous>, transform_indices = @transform_5, window_bounds = array<i64: 128, 128>}, {pipeline_mode = #tpu.pipeline_mode<synchronous>, transform_indices = @transform_6, window_bounds = array<i64: 1, 128>}, {transform_indices = @transform_7, window_bounds = array<i64: 8, 128>}]} {
    %c0 = arith.constant 0 : index
    %c0_0 = arith.constant 0 : index
    %0 = vector.load %arg1[%c0, %c0_0] : memref<8x128xbf16, #tpu.memory_space<vmem>>, vector<8x128xbf16>
    %c0_1 = arith.constant 0 : index
    %c0_2 = arith.constant 0 : index
    %1 = vector.load %arg2[%c0_1, %c0_2] : memref<128x128xbf16, #tpu.memory_space<vmem>>, vector<128x128xbf16>
    %cst = arith.constant dense<0.000000e+00> : vector<8x128xf32>
    %2 = tpu.matmul %0, %1, %cst {dimension_numbers = #tpu.dot_dimension_numbers<[1], [0], [0], [1], [0, 0, 1, 1], [], []>} : vector<8x128xbf16>, vector<128x128xbf16>, vector<8x128xf32> -> vector<8x128xf32>
    %c0_3 = arith.constant 0 : index
    %c0_4 = arith.constant 0 : index
    %3 = vector.load %arg3[%c0_3, %c0_4] : memref<1x128xf32, #tpu.memory_space<vmem>>, vector<1x128xf32>
    %4 = vector.broadcast %3 : vector<1x128xf32> to vector<8x128xf32>
    %5 = arith.addf %2, %4 : vector<8x128xf32>
    %cst_5 = arith.constant 0.000000e+00 : f32
    %6 = vector.broadcast %cst_5 : f32 to vector<8x128xf32>
    %7 = arith.maximumf %5, %6 : vector<8x128xf32>
    %8 = arith.truncf %7 : vector<8x128xf32> to vector<8x128xbf16>
    %c0_6 = arith.constant 0 : index
    %c0_7 = arith.constant 0 : index
    %9 = vector.load %arg4[%c0_6, %c0_7] : memref<128x128xbf16, #tpu.memory_space<vmem>>, vector<128x128xbf16>
    %cst_8 = arith.constant dense<0.000000e+00> : vector<8x128xf32>
    %10 = tpu.matmul %8, %9, %cst_8 {dimension_numbers = #tpu.dot_dimension_numbers<[1], [0], [0], [1], [0, 0, 1, 1], [], []>} : vector<8x128xbf16>, vector<128x128xbf16>, vector<8x128xf32> -> vector<8x128xf32>
    %c0_9 = arith.constant 0 : index
    %c0_10 = arith.constant 0 : index
    %11 = vector.load %arg5[%c0_9, %c0_10] : memref<1x128xf32, #tpu.memory_space<vmem>>, vector<1x128xf32>
    %12 = vector.broadcast %11 : vector<1x128xf32> to vector<8x128xf32>
    %13 = arith.addf %10, %12 : vector<8x128xf32>
    %cst_11 = arith.constant 0.000000e+00 : f32
    %14 = vector.broadcast %cst_11 : f32 to vector<8x128xf32>
    %15 = arith.maximumf %13, %14 : vector<8x128xf32>
    %16 = arith.truncf %15 : vector<8x128xf32> to vector<8x128xbf16>
    %c0_12 = arith.constant 0 : index
    %c0_13 = arith.constant 0 : index
    %17 = vector.load %arg6[%c0_12, %c0_13] : memref<128x128xbf16, #tpu.memory_space<vmem>>, vector<128x128xbf16>
    %cst_14 = arith.constant dense<0.000000e+00> : vector<8x128xf32>
    %18 = tpu.matmul %16, %17, %cst_14 {dimension_numbers = #tpu.dot_dimension_numbers<[1], [0], [0], [1], [0, 0, 1, 1], [], []>} : vector<8x128xbf16>, vector<128x128xbf16>, vector<8x128xf32> -> vector<8x128xf32>
    %c0_15 = arith.constant 0 : index
    %c0_16 = arith.constant 0 : index
    %19 = vector.load %arg7[%c0_15, %c0_16] : memref<1x128xf32, #tpu.memory_space<vmem>>, vector<1x128xf32>
    %20 = vector.broadcast %19 : vector<1x128xf32> to vector<8x128xf32>
    %21 = arith.addf %18, %20 : vector<8x128xf32>
    %c0_17 = arith.constant 0 : index
    %c0_18 = arith.constant 0 : index
    %22 = vector.load %arg8[%c0_17, %c0_18] : memref<8x128xf32, #tpu.memory_space<vmem>>, vector<8x128xf32>
    tpu.vector_store %arg8[%c0_17, %c0_18], %21 {strides = array<i32>} : memref<8x128xf32, #tpu.memory_space<vmem>>, vector<8x128xf32>,
    return
  }
  func.func @transform_0(%arg0: i32) -> (i32, i32) {
    %c0_i32 = arith.constant 0 : i32
    %c0_i32_0 = arith.constant 0 : i32
    return %arg0, %c0_i32 : i32, i32
  }
  func.func @transform_1(%arg0: i32) -> (i32, i32) {
    %c0_i32 = arith.constant 0 : i32
    %c0_i32_0 = arith.constant 0 : i32
    %c0_i32_1 = arith.constant 0 : i32
    return %c0_i32, %c0_i32_0 : i32, i32
  }
  func.func @transform_2(%arg0: i32) -> (i32, i32) {
    %c0_i32 = arith.constant 0 : i32
    %c0_i32_0 = arith.constant 0 : i32
    %c0_i32_1 = arith.constant 0 : i32
    return %c0_i32, %c0_i32_0 : i32, i32
  }
  func.func @transform_3(%arg0: i32) -> (i32, i32) {
    %c0_i32 = arith.constant 0 : i32
    %c0_i32_0 = arith.constant 0 : i32
    %c0_i32_1 = arith.constant 0 : i32
    return %c0_i32, %c0_i32_0 : i32, i32
  }
  func.func @transform_4(%arg0: i32) -> (i32, i32) {
    %c0_i32 = arith.constant 0 : i32
    %c0_i32_0 = arith.constant 0 : i32
    %c0_i32_1 = arith.constant 0 : i32
    return %c0_i32, %c0_i32_0 : i32, i32
  }
  func.func @transform_5(%arg0: i32) -> (i32, i32) {
    %c0_i32 = arith.constant 0 : i32
    %c0_i32_0 = arith.constant 0 : i32
    %c0_i32_1 = arith.constant 0 : i32
    return %c0_i32, %c0_i32_0 : i32, i32
  }
  func.func @transform_6(%arg0: i32) -> (i32, i32) {
    %c0_i32 = arith.constant 0 : i32
    %c0_i32_0 = arith.constant 0 : i32
    %c0_i32_1 = arith.constant 0 : i32
    return %c0_i32, %c0_i32_0 : i32, i32
  }
  func.func @transform_7(%arg0: i32) -> (i32, i32) {
    %c0_i32 = arith.constant 0 : i32
    %c0_i32_0 = arith.constant 0 : i32
    return %arg0, %c0_i32 : i32, i32
  }
}

</mosaic_0001>

<llo_original>
// kernel: condition_encoder.1
$region0: #{condition_encoder.1}
  #allocation0 [shape = 'u32[]', space=smem, size = 0x4, offset = 0x4, fixed_abs, tag = 'smem constant byte address 0x4 - core index']
  #allocation1 [shape = 'u32[72,128]{1,0:T(1,128)}', space=vmem, size = 0x9000, scoped, tag = 'internal scratch']
  %s0 = inlined_call_operand.vmem [shape: bf16[8,128], index: 0, kind: input, shape index: {}]
  %s1 = inlined_call_operand.vmem [shape: bf16[128,128], index: 1, kind: input, shape index: {}]
  %s2 = inlined_call_operand.vmem [shape: f32[1,128], index: 2, kind: input, shape index: {}]
  %s3 = inlined_call_operand.vmem [shape: bf16[128,128], index: 3, kind: input, shape index: {}]
  %s4 = inlined_call_operand.vmem [shape: f32[1,128], index: 4, kind: input, shape index: {}]
  %s5 = inlined_call_operand.vmem [shape: bf16[128,128], index: 5, kind: input, shape index: {}]
  %s6 = inlined_call_operand.vmem [shape: f32[1,128], index: 6, kind: input, shape index: {}]
  %s7 = inlined_call_operand.vmem [shape: f32[8,128], index: 7, kind: output, shape index: {}]
  %s8 = sld [smem:[#allocation0]]
  $region38: #{condition_encoder.1} parent=0
    _
  %s10 = ssub.s32 1, %s8
  %s11 = scalar_select 0, %s10, %s8
  // Predicated region
  $region2: #{condition_encoder.1} parent=0 // pred_check
    _
  $region3: #{condition_encoder.1} parent=0 // pred_check_branch
    %13 = sbr.rel (0) target = $region5
  $region4: #{condition_encoder.1} parent=0 // pred_region
    _
  $region5: #{condition_encoder.1} parent=0 // pred_fallthru
    _
  // Predicated region
  $region6: #{condition_encoder.1} parent=0 // pred_check
    _
  $region7: #{condition_encoder.1} parent=0 // pred_check_branch
    %15 = sbr.rel (0) target = $region9
  $region8: #{condition_encoder.1} parent=0 // pred_region
    _
  $region9: #{condition_encoder.1} parent=0 // pred_fallthru
    _
  // Predicated region
  $region10: #{condition_encoder.1} parent=0 // pred_check
    _
  $region11: #{condition_encoder.1} parent=0 // pred_check_branch
    %17 = sbr.rel (0) target = $region13
  $region12: #{condition_encoder.1} parent=0 // pred_region
    _
  $region13: #{condition_encoder.1} parent=0 // pred_fallthru
    _
  // Predicated region
  $region14: #{condition_encoder.1} parent=0 // pred_check
    _
  $region15: #{condition_encoder.1} parent=0 // pred_check_branch
    %19 = sbr.rel (0) target = $region17
  $region16: #{condition_encoder.1} parent=0 // pred_region
    _
  $region17: #{condition_encoder.1} parent=0 // pred_fallthru
    _
  // Predicated region
  $region18: #{condition_encoder.1} parent=0 // pred_check
    _
  $region19: #{condition_encoder.1} parent=0 // pred_check_branch
    %21 = sbr.rel (0) target = $region21
  $region20: #{condition_encoder.1} parent=0 // pred_region
    _
  $region21: #{condition_encoder.1} parent=0 // pred_fallthru
    _
  // Predicated region
  $region22: #{condition_encoder.1} parent=0 // pred_check
    _
  $region23: #{condition_encoder.1} parent=0 // pred_check_branch
    %23 = sbr.rel (0) target = $region25
  $region24: #{condition_encoder.1} parent=0 // pred_region
    _
  $region25: #{condition_encoder.1} parent=0 // pred_fallthru
    _
  // Predicated region
  $region26: #{condition_encoder.1} parent=0 // pred_check
    _
  $region27: #{condition_encoder.1} parent=0 // pred_check_branch
    %25 = sbr.rel (0) target = $region29
  $region28: #{condition_encoder.1} parent=0 // pred_region
    _
  $region29: #{condition_encoder.1} parent=0 // pred_fallthru
    _
  %v26 = vld [vmem:[%s0] sm:$0xf]
  %v27 = vld [vmem:[%s1] sm:$0xf]
  %v28 = vld [vmem:[%s1 + $0x4] sm:$0xf]
  %v29 = vld [vmem:[%s1 + $0x8] sm:$0xf]
  %v30 = vld [vmem:[%s1 + $0xc] sm:$0xf]
  %v31 = vld [vmem:[%s1 + $0x10] sm:$0xf]
  %v32 = vld [vmem:[%s1 + $0x14] sm:$0xf]
  %v33 = vld [vmem:[%s1 + $0x18] sm:$0xf]
  %v34 = vld [vmem:[%s1 + $0x1c] sm:$0xf]
  %v35 = vld [vmem:[%s1 + $0x20] sm:$0xf]
  %v36 = vld [vmem:[%s1 + $0x24] sm:$0xf]
  %v37 = vld [vmem:[%s1 + $0x28] sm:$0xf]
  %v38 = vld [vmem:[%s1 + $0x2c] sm:$0xf]
  %v39 = vld [vmem:[%s1 + $0x30] sm:$0xf]
  %v40 = vld [vmem:[%s1 + $0x34] sm:$0xf]
  %v41 = vld [vmem:[%s1 + $0x38] sm:$0xf]
  %v42 = vld [vmem:[%s1 + $0x3c] sm:$0xf]
  %v43 = vld [vmem:[%s2] sm:$0x1]
  %v45 = vperm.slane %v43, 0
  %v63 = vunpack.c.l.b16 %v27
  %v64 = vunpack.c.l.b16 %v28
  %v65 = vunpack.c.l.b16 %v29
  %v66 = vunpack.c.l.b16 %v30
  %v67 = vunpack.c.l.b16 %v31
  %v68 = vunpack.c.l.b16 %v32
  %v69 = vunpack.c.l.b16 %v33
  %v70 = vunpack.c.l.b16 %v34
  %v71 = vunpack.c.l.b16 %v35
  %v72 = vunpack.c.l.b16 %v36
  %v73 = vunpack.c.l.b16 %v37
  %v74 = vunpack.c.l.b16 %v38
  %v75 = vunpack.c.l.b16 %v39
  %v76 = vunpack.c.l.b16 %v40
  %v77 = vunpack.c.l.b16 %v41
  %v78 = vunpack.c.l.b16 %v42
  %v79 = vpack.c.b16 %v64, %v63
  %v80 = vpack.c.b16 %v66, %v65
  %v81 = vpack.c.b16 %v68, %v67
  %v82 = vpack.c.b16 %v70, %v69
  %v83 = vpack.c.b16 %v72, %v71
  %v84 = vpack.c.b16 %v74, %v73
  %v85 = vpack.c.b16 %v76, %v75
  %v86 = vpack.c.b16 %v78, %v77
  %95 = vmatpush.bf16.msra.mxu0 %v86
  %96 = vmatpush.bf16.msra.mxu0 %v85
  %97 = vmatpush.bf16.msra.mxu0 %v84
  %98 = vmatpush.bf16.msra.mxu0 %v83
  %99 = vmatpush.bf16.msra.mxu0 %v82
  %100 = vmatpush.bf16.msra.mxu0 %v81
  %101 = vmatpush.bf16.msra.mxu0 %v80
  %102 = vmatpush.bf16.msra.mxu0 %v79
  %103 = vmatmul.bf16.gmra.mxu0 %v26
  %v104 = vpop.f32.mrf.mxu0
  %v105 = vadd.f32 %v45, %v104
  %v106 = vpop.f32.mrf.mxu0
  %107 = vdwg.mxu0
  %v108 = vmax.f32 %v105, 0.0
  %v109 = vpack.c.bf16 %v108, %v108
  %v110 = vld [vmem:[%s3] sm:$0xf]
  %v111 = vld [vmem:[%s3 + $0x4] sm:$0xf]
  %v112 = vld [vmem:[%s3 + $0x8] sm:$0xf]
  %v113 = vld [vmem:[%s3 + $0xc] sm:$0xf]
  %v114 = vld [vmem:[%s3 + $0x10] sm:$0xf]
  %v115 = vld [vmem:[%s3 + $0x14] sm:$0xf]
  %v116 = vld [vmem:[%s3 + $0x18] sm:$0xf]
  %v117 = vld [vmem:[%s3 + $0x1c] sm:$0xf]
  %v118 = vld [vmem:[%s3 + $0x20] sm:$0xf]
  %v119 = vld [vmem:[%s3 + $0x24] sm:$0xf]
  %v120 = vld [vmem:[%s3 + $0x28] sm:$0xf]
  %v121 = vld [vmem:[%s3 + $0x2c] sm:$0xf]
  %v122 = vld [vmem:[%s3 + $0x30] sm:$0xf]
  %v123 = vld [vmem:[%s3 + $0x34] sm:$0xf]
  %v124 = vld [vmem:[%s3 + $0x38] sm:$0xf]
  %v125 = vld [vmem:[%s3 + $0x3c] sm:$0xf]
  %v126 = vld [vmem:[%s4] sm:$0x1]
  %v128 = vperm.slane %v126, 0
  %v146 = vunpack.c.l.b16 %v110
  %v147 = vunpack.c.l.b16 %v111
  %v148 = vunpack.c.l.b16 %v112
  %v149 = vunpack.c.l.b16 %v113
  %v150 = vunpack.c.l.b16 %v114
  %v151 = vunpack.c.l.b16 %v115
  %v152 = vunpack.c.l.b16 %v116
  %v153 = vunpack.c.l.b16 %v117
  %v154 = vunpack.c.l.b16 %v118
  %v155 = vunpack.c.l.b16 %v119
  %v156 = vunpack.c.l.b16 %v120
  %v157 = vunpack.c.l.b16 %v121
  %v158 = vunpack.c.l.b16 %v122
  %v159 = vunpack.c.l.b16 %v123
  %v160 = vunpack.c.l.b16 %v124
  %v161 = vunpack.c.l.b16 %v125
  %v162 = vpack.c.b16 %v147, %v146
  %v163 = vpack.c.b16 %v149, %v148
  %v164 = vpack.c.b16 %v151, %v150
  %v165 = vpack.c.b16 %v153, %v152
  %v166 = vpack.c.b16 %v155, %v154
  %v167 = vpack.c.b16 %v157, %v156
  %v168 = vpack.c.b16 %v159, %v158
  %v169 = vpack.c.b16 %v161, %v160
  %178 = vmatpush.bf16.msra.mxu0 %v169
  %179 = vmatpush.bf16.msra.mxu0 %v168
  %180 = vmatpush.bf16.msra.mxu0 %v167
  %181 = vmatpush.bf16.msra.mxu0 %v166
  %182 = vmatpush.bf16.msra.mxu0 %v165
  %183 = vmatpush.bf16.msra.mxu0 %v164
  %184 = vmatpush.bf16.msra.mxu0 %v163
  %185 = vmatpush.bf16.msra.mxu0 %v162
  %186 = vmatmul.bf16.gmra.mxu0 %v109
  %v187 = vpop.f32.mrf.mxu0
  %v188 = vadd.f32 %v128, %v187
  %v189 = vpop.f32.mrf.mxu0
  %190 = vdwg.mxu0
  %v191 = vmax.f32 %v188, 0.0
  %v192 = vpack.c.bf16 %v191, %v191
  %v193 = vld [vmem:[%s5] sm:$0xf]
  %v194 = vld [vmem:[%s5 + $0x4] sm:$0xf]
  %v195 = vld [vmem:[%s5 + $0x8] sm:$0xf]
  %v196 = vld [vmem:[%s5 + $0xc] sm:$0xf]
  %v197 = vld [vmem:[%s5 + $0x10] sm:$0xf]
  %v198 = vld [vmem:[%s5 + $0x14] sm:$0xf]
  %v199 = vld [vmem:[%s5 + $0x18] sm:$0xf]
  %v200 = vld [vmem:[%s5 + $0x1c] sm:$0xf]
  %v201 = vld [vmem:[%s5 + $0x20] sm:$0xf]
  %v202 = vld [vmem:[%s5 + $0x24] sm:$0xf]
  %v203 = vld [vmem:[%s5 + $0x28] sm:$0xf]
  %v204 = vld [vmem:[%s5 + $0x2c] sm:$0xf]
  %v205 = vld [vmem:[%s5 + $0x30] sm:$0xf]
  %v206 = vld [vmem:[%s5 + $0x34] sm:$0xf]
  %v207 = vld [vmem:[%s5 + $0x38] sm:$0xf]
  %v208 = vld [vmem:[%s5 + $0x3c] sm:$0xf]
  %v209 = vld [vmem:[%s6] sm:$0x1]
  %v211 = vperm.slane %v209, 0
  %v229 = vunpack.c.l.b16 %v193
  %v230 = vunpack.c.l.b16 %v194
  %v231 = vunpack.c.l.b16 %v195
  %v232 = vunpack.c.l.b16 %v196
  %v233 = vunpack.c.l.b16 %v197
  %v234 = vunpack.c.l.b16 %v198
  %v235 = vunpack.c.l.b16 %v199
  %v236 = vunpack.c.l.b16 %v200
  %v237 = vunpack.c.l.b16 %v201
  %v238 = vunpack.c.l.b16 %v202
  %v239 = vunpack.c.l.b16 %v203
  %v240 = vunpack.c.l.b16 %v204
  %v241 = vunpack.c.l.b16 %v205
  %v242 = vunpack.c.l.b16 %v206
  %v243 = vunpack.c.l.b16 %v207
  %v244 = vunpack.c.l.b16 %v208
  %v245 = vpack.c.b16 %v230, %v229
  %v246 = vpack.c.b16 %v232, %v231
  %v247 = vpack.c.b16 %v234, %v233
  %v248 = vpack.c.b16 %v236, %v235
  %v249 = vpack.c.b16 %v238, %v237
  %v250 = vpack.c.b16 %v240, %v239
  %v251 = vpack.c.b16 %v242, %v241
  %v252 = vpack.c.b16 %v244, %v243
  %261 = vmatpush.bf16.msra.mxu0 %v252
  %262 = vmatpush.bf16.msra.mxu0 %v251
  %263 = vmatpush.bf16.msra.mxu0 %v250
  %264 = vmatpush.bf16.msra.mxu0 %v249
  %265 = vmatpush.bf16.msra.mxu0 %v248
  %266 = vmatpush.bf16.msra.mxu0 %v247
  %267 = vmatpush.bf16.msra.mxu0 %v246
  %268 = vmatpush.bf16.msra.mxu0 %v245
  %269 = vmatmul.bf16.gmra.mxu0 %v192
  %v270 = vpop.f32.mrf.mxu0
  %v271 = vadd.f32 %v211, %v270
  %v272 = vpop.f32.mrf.mxu0
  %273 = vdwg.mxu0
  %274 = vst [vmem:[%s7] sm:$0xff] %v271
  // Predicated region
  $region30: #{condition_encoder.1} parent=0 // pred_check
    _
  $region31: #{condition_encoder.1} parent=0 // pred_check_branch
    %276 = sbr.rel (0) target = $region33
  $region32: #{condition_encoder.1} parent=0 // pred_region
    _
  $region33: #{condition_encoder.1} parent=0 // pred_fallthru
    _
  // Predicated region
  $region34: #{condition_encoder.1} parent=0 // pred_check
    _
  $region35: #{condition_encoder.1} parent=0 // pred_check_branch
    %278 = sbr.rel (0) target = $region37
  $region36: #{condition_encoder.1} parent=0 // pred_region
    _
  $region37: #{condition_encoder.1} parent=0 // pred_fallthru
    _

</llo_original>
